<compile_context>
chip_gen: v6e
topology: v6e:2x2x1
jax: 0.10.0
libtpu: 0.0.40
codegen_flags: <defaults>
</compile_context>

<pallas_src>
import functools

import jax
import jax.numpy as jnp
from jax import lax
from jax.experimental import pallas as pl
from jax.experimental.pallas import tpu as pltpu


# --------------------------------------------------------------------------
# Fused Pallas kernel: dispatch gather -> single-head attention -> combine
# --------------------------------------------------------------------------

def _mod_fused_kernel(x_ref, disp_ref, comb_ref, wqkv_ref, wo_ref, out_ref):
    # x:    (1, N, D)  bf16
    # disp: (1, N, C)  bf16   (one-hot dispatch, expert axis already squeezed)
    # comb: (1, N, C)  bf16   (gate-scaled combine)
    # wqkv: (D, 3D)    bf16
    # wo:   (D, D)     bf16
    # out:  (1, N, D)  f32
    x = x_ref[0]
    disp = disp_ref[0]
    comb = comb_ref[0]
    D = x.shape[-1]

    # dispatch gather: einsum('bnd,bnc->bcd')  ->  (C, D), f32 accumulate.
    attn_in = lax.dot_general(
        disp, x,
        dimension_numbers=(((0,), (0,)), ((), ())),
        preferred_element_type=jnp.float32)                         # (C, D)

    # fused QKV projection: one (C,D) x (D,3D) MXU pass.
    qkv = jnp.dot(attn_in.astype(jnp.bfloat16), wqkv_ref[...],
                  preferred_element_type=jnp.float32)               # (C, 3D)
    q = qkv[:, :D]
    k = qkv[:, D:2 * D]
    v = qkv[:, 2 * D:]

    # single-head self-attention over the routed tokens (softmax in f32).
    scale = 1.0 / jnp.sqrt(jnp.float32(D))
    s = lax.dot_general(q.astype(jnp.bfloat16), k.astype(jnp.bfloat16),
                        (((1,), (1,)), ((), ())),
                        preferred_element_type=jnp.float32) * scale  # (C, C)
    s = s - jnp.max(s, axis=-1, keepdims=True)
    p = jnp.exp(s)
    p = p * pl.reciprocal(jnp.sum(p, axis=-1, keepdims=True), approx=True)

    o = jnp.dot(p.astype(jnp.bfloat16), v.astype(jnp.bfloat16),
                preferred_element_type=jnp.float32)                  # (C, D)
    attn_out = jnp.dot(o.astype(jnp.bfloat16), wo_ref[...],
                       preferred_element_type=jnp.float32)           # (C, D)

    # combine scatter: einsum('bcd,bnc->bnd')  ->  (N, D).
    out_ref[0] = jnp.dot(comb, attn_out.astype(jnp.bfloat16),
                         preferred_element_type=jnp.float32)


def mod_fused(x, disp, comb, wqkv, wo):
    """Fused dispatch->attention->combine, one batch element per grid step."""
    B, N, D = x.shape
    C = disp.shape[-1]
    bf = jnp.bfloat16
    return pl.pallas_call(
        _mod_fused_kernel,
        out_shape=jax.ShapeDtypeStruct((B, N, D), jnp.float32),
        grid=(B,),
        in_specs=[
            pl.BlockSpec((1, N, D), lambda i: (i, 0, 0)),
            pl.BlockSpec((1, N, C), lambda i: (i, 0, 0)),
            pl.BlockSpec((1, N, C), lambda i: (i, 0, 0)),
            pl.BlockSpec((D, 3 * D), lambda i: (0, 0)),   # broadcast weights
            pl.BlockSpec((D, D), lambda i: (0, 0)),
        ],
        out_specs=pl.BlockSpec((1, N, D), lambda i: (i, 0, 0)),
        compiler_params=pltpu.CompilerParams(
            dimension_semantics=("parallel",)),
    )(x.astype(bf), disp.astype(bf), comb.astype(bf),
      wqkv.astype(bf), wo.astype(bf))


# --------------------------------------------------------------------------
# Router glue (ExpertChoiceRouter, num_experts = 1) + MoD forward
# --------------------------------------------------------------------------

def mod_layer_forward(x, params, capacity_factor):
    B, N, D = x.shape
    expert_capacity = int(N * capacity_factor)

    # Router gate: (N,D)x(D,1) matvec + z-loss + softmax + top-k.  Left in XLA
    # on purpose: with E=1 the Pallas output would be lane-width-1 (masked
    # partial stores) and this fuses with the softmax/top-k glue anyway.
    logits = jnp.einsum('bnd,de->bne', x, params['router_w']) + params['router_b']
    log_z = jax.nn.logsumexp(logits, axis=-1)                       # [B, N]
    router_z_loss = jnp.sum(log_z ** 2) / (B * N)
    probs = jax.nn.softmax(logits, axis=-1)                         # [B, N, E]
    probs_t = jnp.transpose(probs, (0, 2, 1))                       # [B, E, N]
    # TODO(synk): top-k + one-hot dispatch construction has no clean Pallas
    # equivalent; kept in plain JAX.  For realistic N (>>128) replace the dense
    # one-hot dispatch/combine matmuls below with a scalar-prefetch row gather
    # (PrefetchScalarGridSpec over expert_index) instead of materializing [B,N,C].
    expert_gate, expert_index = lax.top_k(probs_t, expert_capacity)  # [B, E, C]
    dispatch = jax.nn.one_hot(expert_index, N, dtype=x.dtype)        # [B, E, C, N]
    dispatch = jnp.transpose(dispatch, (0, 3, 1, 2))                 # [B, N, E, C]
    combine = jnp.einsum('bec,bnec->bnec', expert_gate, dispatch)    # [B, N, E, C]

    # E == 1 for MoD -> squeeze the expert axis (matches .squeeze(1)/.unsqueeze(1))
    disp = dispatch[:, :, 0, :]                                      # [B, N, C]
    comb = combine[:, :, 0, :]                                       # [B, N, C]

    # Fused QKV weight (D, 3D) so the kernel does one MXU pass for q/k/v.
    wqkv = jnp.concatenate([params['wq'], params['wk'], params['wv']], axis=1)

    out = mod_fused(x, disp, comb, wqkv, params['wo'])               # [B, N, D]
    return out, router_z_loss


# --------------------------------------------------------------------------
# Pure-JAX reference (mirrors the PyTorch forward, einsum for einsum)
# --------------------------------------------------------------------------

def mod_layer_reference(x, params, capacity_factor):
    B, N, D = x.shape
    expert_capacity = int(N * capacity_factor)
    logits = jnp.einsum('bnd,de->bne', x, params['router_w']) + params['router_b']
    log_z = jax.nn.logsumexp(logits, axis=-1)
    z_loss = jnp.sum(log_z ** 2) / (B * N)
    probs = jax.nn.softmax(logits, axis=-1)
    gate, idx = lax.top_k(jnp.transpose(probs, (0, 2, 1)), expert_capacity)
    dispatch = jnp.transpose(jax.nn.one_hot(idx, N, dtype=x.dtype), (0, 3, 1, 2))
    combine = jnp.einsum('bec,bnec->bnec', gate, dispatch)
    attn_inputs = jnp.einsum('bnd,bnec->becd', x, dispatch)[:, 0]       # squeeze(1)
    q = attn_inputs @ params['wq']
    k = attn_inputs @ params['wk']
    v = attn_inputs @ params['wv']
    s = jnp.einsum('bcd,bkd->bck', q, k) / jnp.sqrt(jnp.float32(D))
    p = jax.nn.softmax(s, axis=-1)
    attn_outputs = (p @ v) @ params['wo']
    attn_outputs = attn_outputs[:, None]                                # unsqueeze(1)
    out = jnp.einsum('becd,bnec->bnd', attn_outputs, combine)
    return out, z_loss


# --------------------------------------------------------------------------

if __name__ == "__main__":
    B, N, D, E = 2, 16, 128, 1
    capacity_factor = 0.5

    key = jax.random.PRNGKey(0)
    kx, kw, kq, kk, kv, ko = jax.random.split(key, 6)
    x = jax.random.normal(kx, (B, N, D), dtype=jnp.float32)
    params = dict(
        router_w=jax.random.normal(kw, (D, E), jnp.float32) * 0.02,
        router_b=jnp.zeros((1, E), jnp.float32),
        wq=jax.random.normal(kq, (D, D), jnp.float32) * 0.05,
        wk=jax.random.normal(kk, (D, D), jnp.float32) * 0.05,
        wv=jax.random.normal(kv, (D, D), jnp.float32) * 0.05,
        wo=jax.random.normal(ko, (D, D), jnp.float32) * 0.05,
    )

    fwd = jax.jit(functools.partial(mod_layer_forward, capacity_factor=capacity_factor))
    out, z_loss = fwd(x, params)
    jax.block_until_ready((out, z_loss))

    ref_out, ref_z = mod_layer_reference(x, params, capacity_factor)
    assert out.shape == (B, N, D)
    assert jnp.allclose(out, ref_out, atol=2e-2, rtol=2e-2), "output mismatch"
    assert jnp.allclose(z_loss, ref_z, atol=1e-4, rtol=1e-4), "z-loss mismatch"

    print("KERNEL_OK")
</pallas_src>

<mosaic_0001>
module attributes {stable_mosaic.version = 11 : i64} {
  func.func @_mod_fused_kernel(%arg0: i32, %arg1: memref<1x16x128xbf16, #tpu.memory_space<vmem>>, %arg2: memref<1x16x8xbf16, #tpu.memory_space<vmem>>, %arg3: memref<1x16x8xbf16, #tpu.memory_space<vmem>>, %arg4: memref<128x384xbf16, #tpu.memory_space<vmem>>, %arg5: memref<128x128xbf16, #tpu.memory_space<vmem>>, %arg6: memref<1x16x128xf32, #tpu.memory_space<vmem>>) attributes {dimension_semantics = [#tpu.dimension_semantics<parallel>], iteration_bounds = array<i64: 2>, scalar_prefetch = 0 : i64, scratch_operands = 0 : i64, tpu.core_type = #tpu.core_type<tc>, window_params = [{transform_indices = @transform_0, window_bounds = array<i64: 1, 16, 128>}, {transform_indices = @transform_1, window_bounds = array<i64: 1, 16, 8>}, {transform_indices = @transform_2, window_bounds = array<i64: 1, 16, 8>}, {pipeline_mode = #tpu.pipeline_mode<synchronous>, transform_indices = @transform_3, window_bounds = array<i64: 128, 384>}, {pipeline_mode = #tpu.pipeline_mode<synchronous>, transform_indices = @transform_4, window_bounds = array<i64: 128, 128>}, {transform_indices = @transform_5, window_bounds = array<i64: 1, 16, 128>}]} {
    %c0 = arith.constant 0 : index
    %c0_0 = arith.constant 0 : index
    %c0_1 = arith.constant 0 : index
    %0 = vector.load %arg1[%c0, %c0_0, %c0_1] : memref<1x16x128xbf16, #tpu.memory_space<vmem>>, vector<1x16x128xbf16>
    %1 = vector.shape_cast %0 : vector<1x16x128xbf16> to vector<16x128xbf16>
    %c0_2 = arith.constant 0 : index
    %c0_3 = arith.constant 0 : index
    %c0_4 = arith.constant 0 : index
    %2 = vector.load %arg2[%c0_2, %c0_3, %c0_4] : memref<1x16x8xbf16, #tpu.memory_space<vmem>>, vector<1x16x8xbf16>
    %3 = vector.shape_cast %2 : vector<1x16x8xbf16> to vector<16x8xbf16>
    %c0_5 = arith.constant 0 : index
    %c0_6 = arith.constant 0 : index
    %c0_7 = arith.constant 0 : index
    %4 = vector.load %arg3[%c0_5, %c0_6, %c0_7] : memref<1x16x8xbf16, #tpu.memory_space<vmem>>, vector<1x16x8xbf16>
    %5 = vector.shape_cast %4 : vector<1x16x8xbf16> to vector<16x8xbf16>
    %cst = arith.constant dense<0.000000e+00> : vector<8x128xf32>
    %6 = tpu.matmul %3, %1, %cst {dimension_numbers = #tpu.dot_dimension_numbers<[0], [0], [1], [1], [0, 1, 1, 1], [], []>} : vector<16x8xbf16>, vector<16x128xbf16>, vector<8x128xf32> -> vector<8x128xf32>
    %7 = arith.truncf %6 : vector<8x128xf32> to vector<8x128xbf16>
    %c0_8 = arith.constant 0 : index
    %c0_9 = arith.constant 0 : index
    %8 = vector.load %arg4[%c0_8, %c0_9] : memref<128x384xbf16, #tpu.memory_space<vmem>>, vector<128x384xbf16>
    %cst_10 = arith.constant dense<0.000000e+00> : vector<8x384xf32>
    %9 = tpu.matmul %7, %8, %cst_10 {dimension_numbers = #tpu.dot_dimension_numbers<[1], [0], [0], [1], [0, 0, 1, 1], [], []>} : vector<8x128xbf16>, vector<128x384xbf16>, vector<8x384xf32> -> vector<8x384xf32>
    %10 = vector.extract_strided_slice %9 {offsets = [0, 0], sizes = [8, 128], strides = [1, 1]} : vector<8x384xf32> to vector<8x128xf32>
    %11 = vector.extract_strided_slice %9 {offsets = [0, 128], sizes = [8, 128], strides = [1, 1]} : vector<8x384xf32> to vector<8x128xf32>
    %12 = vector.extract_strided_slice %9 {offsets = [0, 256], sizes = [8, 128], strides = [1, 1]} : vector<8x384xf32> to vector<8x128xf32>
    %cst_11 = arith.constant 1.280000e+02 : f32
    %13 = math.sqrt %cst_11 : f32
    %cst_12 = arith.constant 1.000000e+00 : f32
    %14 = arith.divf %cst_12, %13 : f32
    %15 = arith.truncf %10 : vector<8x128xf32> to vector<8x128xbf16>
    %16 = arith.truncf %11 : vector<8x128xf32> to vector<8x128xbf16>
    %cst_13 = arith.constant dense<0.000000e+00> : vector<8x8xf32>
    %17 = tpu.matmul %15, %16, %cst_13 {dimension_numbers = #tpu.dot_dimension_numbers<[1], [1], [0], [0], [0, 0, 1, 0], [], []>} : vector<8x128xbf16>, vector<8x128xbf16>, vector<8x8xf32> -> vector<8x8xf32>
    %18 = vector.broadcast %14 : f32 to vector<8x8xf32>
    %19 = arith.mulf %17, %18 : vector<8x8xf32>
    %cst_14 = arith.constant dense<0xFF800000> : vector<8xf32>
    %20 = vector.multi_reduction <maximumf>, %19, %cst_14 [1] : vector<8x8xf32> to vector<8xf32>
    %21 = vector.shape_cast %20 : vector<8xf32> to vector<8x1xf32>
    %22 = vector.broadcast %21 : vector<8x1xf32> to vector<8x8xf32>
    %23 = arith.subf %19, %22 : vector<8x8xf32>
    %24 = math.exp %23 : vector<8x8xf32>
    %cst_15 = arith.constant dense<0.000000e+00> : vector<8xf32>
    %25 = vector.multi_reduction <add>, %24, %cst_15 [1] : vector<8x8xf32> to vector<8xf32>
    %26 = vector.shape_cast %25 : vector<8xf32> to vector<8x1xf32>
    %27 = tpu.reciprocal %26 {approx = true} : vector<8x1xf32> -> vector<8x1xf32>
    %28 = vector.broadcast %27 : vector<8x1xf32> to vector<8x8xf32>
    %29 = arith.mulf %24, %28 : vector<8x8xf32>
    %30 = arith.truncf %29 : vector<8x8xf32> to vector<8x8xbf16>
    %31 = arith.truncf %12 : vector<8x128xf32> to vector<8x128xbf16>
    %cst_16 = arith.constant dense<0.000000e+00> : vector<8x128xf32>
    %32 = tpu.matmul %30, %31, %cst_16 {dimension_numbers = #tpu.dot_dimension_numbers<[1], [0], [0], [1], [0, 0, 1, 1], [], []>} : vector<8x8xbf16>, vector<8x128xbf16>, vector<8x128xf32> -> vector<8x128xf32>
    %33 = arith.truncf %32 : vector<8x128xf32> to vector<8x128xbf16>
    %c0_17 = arith.constant 0 : index
    %c0_18 = arith.constant 0 : index
    %34 = vector.load %arg5[%c0_17, %c0_18] : memref<128x128xbf16, #tpu.memory_space<vmem>>, vector<128x128xbf16>
    %cst_19 = arith.constant dense<0.000000e+00> : vector<8x128xf32>
    %35 = tpu.matmul %33, %34, %cst_19 {dimension_numbers = #tpu.dot_dimension_numbers<[1], [0], [0], [1], [0, 0, 1, 1], [], []>} : vector<8x128xbf16>, vector<128x128xbf16>, vector<8x128xf32> -> vector<8x128xf32>
    %36 = arith.truncf %35 : vector<8x128xf32> to vector<8x128xbf16>
    %cst_20 = arith.constant dense<0.000000e+00> : vector<16x128xf32>
    %37 = tpu.matmul %5, %36, %cst_20 {dimension_numbers = #tpu.dot_dimension_numbers<[1], [0], [0], [1], [0, 0, 1, 1], [], []>} : vector<16x8xbf16>, vector<8x128xbf16>, vector<16x128xf32> -> vector<16x128xf32>
    %c0_21 = arith.constant 0 : index
    %c0_22 = arith.constant 0 : index
    %c0_23 = arith.constant 0 : index
    %38 = vector.load %arg6[%c0_21, %c0_22, %c0_23] : memref<1x16x128xf32, #tpu.memory_space<vmem>>, vector<1x16x128xf32>
    %39 = vector.shape_cast %38 : vector<1x16x128xf32> to vector<16x128xf32>
    %40 = vector.shape_cast %37 : vector<16x128xf32> to vector<1x16x128xf32>
    tpu.vector_store %arg6[%c0_21, %c0_22, %c0_23], %40 {strides = array<i32>} : memref<1x16x128xf32, #tpu.memory_space<vmem>>, vector<1x16x128xf32>,
    return
  }
  func.func @transform_0(%arg0: i32) -> (i32, i32, i32) {
    %c0_i32 = arith.constant 0 : i32
    %c0_i32_0 = arith.constant 0 : i32
    %c0_i32_1 = arith.constant 0 : i32
    return %arg0, %c0_i32, %c0_i32_0 : i32, i32, i32
  }
  func.func @transform_1(%arg0: i32) -> (i32, i32, i32) {
    %c0_i32 = arith.constant 0 : i32
    %c0_i32_0 = arith.constant 0 : i32
    %c0_i32_1 = arith.constant 0 : i32
    return %arg0, %c0_i32, %c0_i32_0 : i32, i32, i32
  }
  func.func @transform_2(%arg0: i32) -> (i32, i32, i32) {
    %c0_i32 = arith.constant 0 : i32
    %c0_i32_0 = arith.constant 0 : i32
    %c0_i32_1 = arith.constant 0 : i32
    return %arg0, %c0_i32, %c0_i32_0 : i32, i32, i32
  }
  func.func @transform_3(%arg0: i32) -> (i32, i32) {
    %c0_i32 = arith.constant 0 : i32
    %c0_i32_0 = arith.constant 0 : i32
    %c0_i32_1 = arith.constant 0 : i32
    return %c0_i32, %c0_i32_0 : i32, i32
  }
  func.func @transform_4(%arg0: i32) -> (i32, i32) {
    %c0_i32 = arith.constant 0 : i32
    %c0_i32_0 = arith.constant 0 : i32
    %c0_i32_1 = arith.constant 0 : i32
    return %c0_i32, %c0_i32_0 : i32, i32
  }
  func.func @transform_5(%arg0: i32) -> (i32, i32, i32) {
    %c0_i32 = arith.constant 0 : i32
    %c0_i32_0 = arith.constant 0 : i32
    %c0_i32_1 = arith.constant 0 : i32
    return %arg0, %c0_i32, %c0_i32_0 : i32, i32, i32
  }
}

</mosaic_0001>

<llo_original>
// kernel: mod_layer_forward.1
$region0: #{mod_layer_forward.1}
  #allocation0 [shape = 'u32[]', space=smem, size = 0x4, offset = 0x4, fixed_abs, tag = 'smem constant byte address 0x4 - core index']
  #allocation1 [shape = 'u32[144,128]{1,0:T(1,128)}', space=vmem, size = 0x12000, scoped, tag = 'internal scratch']
  %s0 = inlined_call_operand.vmem [shape: bf16[2,16,128], index: 0, kind: input, shape index: {}]
  %s1 = inlined_call_operand.vmem [shape: bf16[2,16,8], index: 1, kind: input, shape index: {}]
  %s2 = inlined_call_operand.vmem [shape: bf16[2,16,8], index: 2, kind: input, shape index: {}]
  %s3 = inlined_call_operand.vmem [shape: bf16[128,384], index: 3, kind: input, shape index: {}]
  %s4 = inlined_call_operand.vmem [shape: bf16[128,128], index: 4, kind: input, shape index: {}]
  %s5 = inlined_call_operand.hbm [shape: f32[2,16,128], index: 5, kind: output, shape index: {}]
  %s6 = sld [smem:[#allocation0]]
  $region53: #{mod_layer_forward.1} parent=0
    _
  %s8 = ssub.s32 1, %s6
  %s9 = scalar_select 0, %s8, %s6
  $region1: #{mod_layer_forward.1} parent=0
    #allocation2 [shape = 'u8[16384]{0}', space=vmem, size = 0x4000, scoped, tag = 'output window, operand 0']
    #allocation3 [shape = 's32[2]{0}', space=sflag, size = 0x8, scoped, tag = 'scoped memory for mod_layer_forward.1']
    %10 = vsyncpa [#allocation3], 0
    %s11 = scalar_lea.sflag [#allocation3], 1
    %12 = vsyncpa %s11, 0
    loop: start=0, step=1, limit=4
    $region2: #{mod_layer_forward.1} parent=1 // loop_pre_header
      _
    $region3: #{mod_layer_forward.1} parent=1 // loop_header
      %s14 = sphi 0, %s18
      %p15 = scmp.ge.s32.totalorder %s14, 4
      %s24 = sphi 0, %s26
      %s27 = sphi 0, %s24
      %s28 = sphi 0, %s27
      %s44 = sphi 0, %s28
      %s50 = sphi 0, %s52
      %s53 = sphi 0, %s50
      %s54 = sphi 0, %s53
      %s70 = sphi 0, %s54
      %s76 = sphi 0, %s78
      %s79 = sphi 0, %s76
      %s80 = sphi 0, %s79
      %s96 = sphi 0, %s80
      %s100 = sphi 0, %s100
      %s102 = sphi 0, %s100
      %s103 = sphi 0, %s102
      %s117 = sphi 0, %s103
      %s121 = sphi 0, %s121
      %s123 = sphi 0, %s121
      %s124 = sphi 0, %s123
      %s138 = sphi 0, %s124
      %s144 = sphi 0, %s146
      %s147 = sphi 0, %s144
      %s148 = sphi 0, %s147
      %s164 = sphi 0, %s148
    $region4: #{mod_layer_forward.1} parent=1 // loop_header_branch
      %17 = sbr.rel (%p15) target = $region8
    $region5: #{mod_layer_forward.1} parent=1 // loop_body
      %s19 = ssub.s32 %s14, 1
      %s20 = ssub.s32 %s14, 2
      %s21 = sadd.s32 %s14, 1
      %s22 = ssub.s32 %s14, %s21
      %p23 = scmp.eq.s32.totalorder %s22, 0
      %s25 = sadd.s32 %s24, 1
      %s26 = scalar_select %p23, %s24, %s25
      %p29 = pneg %p23
      %p30 = scmp.eq.s32.totalorder %s14, 1
      %p31 = por %p29, %p30
      %p32 = scmp.ne.s32.totalorder %s24, %s27
      %p33 = scmp.eq.s32.totalorder %s14, 0
      %p34 = por %p32, %p33
      %p35 = scmp.ne.s32.totalorder %s24, %s27
      %p36 = scmp.eq.s32.totalorder %s19, 1
      %p37 = por %p35, %p36
      %p38 = scmp.ne.s32.totalorder %s27, %s28
      %p39 = scmp.eq.s32.totalorder %s19, 0
      %p40 = por %p38, %p39
      %p41 = scmp.ne.s32.totalorder %s27, %s28
      %p42 = scmp.eq.s32.totalorder %s20, 1
      %p43 = por %p41, %p42
      %p45 = scmp.ne.s32.totalorder %s28, %s44
      %p46 = scmp.eq.s32.totalorder %s20, 0
      %p47 = por %p45, %p46
      %s48 = ssub.s32 %s14, %s21
      %p49 = scmp.eq.s32.totalorder %s48, 0
      %s51 = sadd.s32 %s50, 1
      %s52 = scalar_select %p49, %s50, %s51
      %p55 = pneg %p49
      %p56 = scmp.eq.s32.totalorder %s14, 1
      %p57 = por %p55, %p56
      %p58 = scmp.ne.s32.totalorder %s50, %s53
      %p59 = scmp.eq.s32.totalorder %s14, 0
      %p60 = por %p58, %p59
      %p61 = scmp.ne.s32.totalorder %s50, %s53
      %p62 = scmp.eq.s32.totalorder %s19, 1
      %p63 = por %p61, %p62
      %p64 = scmp.ne.s32.totalorder %s53, %s54
      %p65 = scmp.eq.s32.totalorder %s19, 0
      %p66 = por %p64, %p65
      %p67 = scmp.ne.s32.totalorder %s53, %s54
      %p68 = scmp.eq.s32.totalorder %s20, 1
      %p69 = por %p67, %p68
      %p71 = scmp.ne.s32.totalorder %s54, %s70
      %p72 = scmp.eq.s32.totalorder %s20, 0
      %p73 = por %p71, %p72
      %s74 = ssub.s32 %s14, %s21
      %p75 = scmp.eq.s32.totalorder %s74, 0
      %s77 = sadd.s32 %s76, 1
      %s78 = scalar_select %p75, %s76, %s77
      %p81 = pneg %p75
      %p82 = scmp.eq.s32.totalorder %s14, 1
      %p83 = por %p81, %p82
      %p84 = scmp.ne.s32.totalorder %s76, %s79
      %p85 = scmp.eq.s32.totalorder %s14, 0
      %p86 = por %p84, %p85
      %p87 = scmp.ne.s32.totalorder %s76, %s79
      %p88 = scmp.eq.s32.totalorder %s19, 1
      %p89 = por %p87, %p88
      %p90 = scmp.ne.s32.totalorder %s79, %s80
      %p91 = scmp.eq.s32.totalorder %s19, 0
      %p92 = por %p90, %p91
      %p93 = scmp.ne.s32.totalorder %s79, %s80
      %p94 = scmp.eq.s32.totalorder %s20, 1
      %p95 = por %p93, %p94
      %p97 = scmp.ne.s32.totalorder %s80, %s96
      %p98 = scmp.eq.s32.totalorder %s20, 0
      %p99 = por %p97, %p98
      %s101 = sadd.s32 %s100, 1
      %p104 = scmp.eq.s32.totalorder %s14, 1
      %p105 = scmp.ne.s32.totalorder %s100, %s102
      %p106 = scmp.eq.s32.totalorder %s14, 0
      %p107 = por %p105, %p106
      %p108 = scmp.ne.s32.totalorder %s100, %s102
      %p109 = scmp.eq.s32.totalorder %s19, 1
      %p110 = por %p108, %p109
      %p111 = scmp.ne.s32.totalorder %s102, %s103
      %p112 = scmp.eq.s32.totalorder %s19, 0
      %p113 = por %p111, %p112
      %p114 = scmp.ne.s32.totalorder %s102, %s103
      %p115 = scmp.eq.s32.totalorder %s20, 1
      %p116 = por %p114, %p115
      %p118 = scmp.ne.s32.totalorder %s103, %s117
      %p119 = scmp.eq.s32.totalorder %s20, 0
      %p120 = por %p118, %p119
      %s122 = sadd.s32 %s121, 1
      %p125 = scmp.eq.s32.totalorder %s14, 1
      %p126 = scmp.ne.s32.totalorder %s121, %s123
      %p127 = scmp.eq.s32.totalorder %s14, 0
      %p128 = por %p126, %p127
      %p129 = scmp.ne.s32.totalorder %s121, %s123
      %p130 = scmp.eq.s32.totalorder %s19, 1
      %p131 = por %p129, %p130
      %p132 = scmp.ne.s32.totalorder %s123, %s124
      %p133 = scmp.eq.s32.totalorder %s19, 0
      %p134 = por %p132, %p133
      %p135 = scmp.ne.s32.totalorder %s123, %s124
      %p136 = scmp.eq.s32.totalorder %s20, 1
      %p137 = por %p135, %p136
      %p139 = scmp.ne.s32.totalorder %s124, %s138
      %p140 = scmp.eq.s32.totalorder %s20, 0
      %p141 = por %p139, %p140
      %s142 = ssub.s32 %s14, %s21
      %p143 = scmp.eq.s32.totalorder %s142, 0
      %s145 = sadd.s32 %s144, 1
      %s146 = scalar_select %p143, %s144, %s145
      %p149 = pneg %p143
      %p150 = scmp.eq.s32.totalorder %s14, 1
      %p151 = por %p149, %p150
      %p152 = scmp.ne.s32.totalorder %s144, %s147
      %p153 = scmp.eq.s32.totalorder %s14, 0
      %p154 = por %p152, %p153
      %p155 = scmp.ne.s32.totalorder %s144, %s147
      %p156 = scmp.eq.s32.totalorder %s19, 1
      %p157 = por %p155, %p156
      %p158 = scmp.ne.s32.totalorder %s147, %s148
      %p159 = scmp.eq.s32.totalorder %s19, 0
      %p160 = por %p158, %p159
      %p161 = scmp.ne.s32.totalorder %s147, %s148
      %p162 = scmp.eq.s32.totalorder %s20, 1
      %p163 = por %p161, %p162
      %p165 = scmp.ne.s32.totalorder %s148, %s164
      %p166 = scmp.eq.s32.totalorder %s20, 0
      %p167 = por %p165, %p166
      %p168 = scmp.le.s32.totalorder 1, %s14
      %p169 = scmp.lt.s32.totalorder %s14, 3
      %p170 = pnand %p168, %p169
      %p171 = pneg %p170
      // Predicated region
      $region9: #{mod_layer_forward.1} parent=5 // pred_check
        _
      $region10: #{mod_layer_forward.1} parent=5 // pred_check_branch
        %173 = sbr.rel (%p170) target = $region12
      $region11: #{mod_layer_forward.1} parent=5 // pred_region
        %s174 = ssub.s32 %s14, 1
        // Predicated region
        $region13: #{mod_layer_forward.1} parent=11 // pred_check
          %p175 = pneg %p113
        $region14: #{mod_layer_forward.1} parent=11 // pred_check_branch
          %177 = sbr.rel (%p175) target = $region16
        $region15: #{mod_layer_forward.1} parent=11 // pred_region
          _
        $region16: #{mod_layer_forward.1} parent=11 // pred_fallthru
          _
        // Predicated region
        $region17: #{mod_layer_forward.1} parent=11 // pred_check
          %p178 = pneg %p134
        $region18: #{mod_layer_forward.1} parent=11 // pred_check_branch
          %180 = sbr.rel (%p178) target = $region20
        $region19: #{mod_layer_forward.1} parent=11 // pred_region
          _
        $region20: #{mod_layer_forward.1} parent=11 // pred_fallthru
          _
      $region12: #{mod_layer_forward.1} parent=5 // pred_fallthru
        _
      %p181 = scmp.lt.s32.totalorder %s14, 2
      // Predicated region
      $region21: #{mod_layer_forward.1} parent=5 // pred_check
        %p182 = pneg %p181
      $region22: #{mod_layer_forward.1} parent=5 // pred_check_branch
        %184 = sbr.rel (%p182) target = $region24
      $region23: #{mod_layer_forward.1} parent=5 // pred_region
        // Predicated region
        $region25: #{mod_layer_forward.1} parent=23 // pred_check
          %p185 = pneg %p34
        $region26: #{mod_layer_forward.1} parent=23 // pred_check_branch
          %187 = sbr.rel (%p185) target = $region28
        $region27: #{mod_layer_forward.1} parent=23 // pred_region
          %p188 = scmp.lt.s32.totalorder %s14, 1
          %s189 = scalar_select %p188, %s14, 1
          %s190 = smul.addr %s189, 2
          %s191 = smul.addr %s190, 4
          %s192 = scalar_lea.vmem %s0, %s191
        $region28: #{mod_layer_forward.1} parent=23 // pred_fallthru
          _
        // Predicated region
        $region29: #{mod_layer_forward.1} parent=23 // pred_check
          %p193 = pneg %p60
        $region30: #{mod_layer_forward.1} parent=23 // pred_check_branch
          %195 = sbr.rel (%p193) target = $region32
        $region31: #{mod_layer_forward.1} parent=23 // pred_region
          %p196 = scmp.lt.s32.totalorder %s14, 1
          %s197 = scalar_select %p196, %s14, 1
          %s198 = smul.addr %s197, 2
          %s199 = smul.addr %s198, 4
          %s200 = scalar_lea.vmem %s1, %s199
        $region32: #{mod_layer_forward.1} parent=23 // pred_fallthru
          _
        // Predicated region
        $region33: #{mod_layer_forward.1} parent=23 // pred_check
          %p201 = pneg %p86
        $region34: #{mod_layer_forward.1} parent=23 // pred_check_branch
          %203 = sbr.rel (%p201) target = $region36
        $region35: #{mod_layer_forward.1} parent=23 // pred_region
          %p204 = scmp.lt.s32.totalorder %s14, 1
          %s205 = scalar_select %p204, %s14, 1
          %s206 = smul.addr %s205, 2
          %s207 = smul.addr %s206, 4
          %s208 = scalar_lea.vmem %s2, %s207
        $region36: #{mod_layer_forward.1} parent=23 // pred_fallthru
          _
      $region24: #{mod_layer_forward.1} parent=5 // pred_fallthru
        _
      %p209 = scmp.le.s32.totalorder 1, %s14
      %p210 = scmp.lt.s32.totalorder %s14, 3
      %p211 = pnand %p209, %p210
      %p212 = pneg %p211
      // Predicated region
      $region37: #{mod_layer_forward.1} parent=5 // pred_check
        _
      $region38: #{mod_layer_forward.1} parent=5 // pred_check_branch
        %214 = sbr.rel (%p211) target = $region40
      $region39: #{mod_layer_forward.1} parent=5 // pred_region
        %s215 = ssub.s32 %s14, 1
        %p216 = scmp.lt.s32.totalorder %s19, 1
        %s217 = scalar_select %p216, %s19, 1
        %s218 = smul.addr %s217, 2
        %s219 = smul.addr %s218, 4
        %s220 = scalar_lea.vmem %s0, %s219
        %p221 = pneg %p40
        %p222 = pneg %p37
        %p223 = scmp.lt.s32.totalorder %s19, 1
        %s224 = scalar_select %p223, %s19, 1
        %s225 = smul.addr %s224, 2
        %s226 = smul.addr %s225, 4
        %s227 = scalar_lea.vmem %s1, %s226
        %p228 = pneg %p66
        %p229 = pneg %p63
        %p230 = scmp.lt.s32.totalorder %s19, 1
        %s231 = scalar_select %p230, %s19, 1
        %s232 = smul.addr %s231, 2
        %s233 = smul.addr %s232, 4
        %s234 = scalar_lea.vmem %s2, %s233
        %p235 = pneg %p92
        %p236 = pneg %p89
        %p237 = pneg %p113
        %p238 = pneg %p110
        %p239 = pneg %p134
        %p240 = pneg %p131
        %p241 = pneg %p160
        %p242 = pneg %p157
        %s243 = sand.u32 %s147, 1
        %s244 = scalar_lea.sflag [#allocation3], %s243
        %s245 = sand.u32 %s147, 1
        %s246 = smul.addr %s245, 16
        %s247 = scalar_lea.vmem [#allocation2], %s246
        %p248 = scmp.lt.s32.totalorder %s19, 1
        %s249 = scalar_select %p248, %s19, 1
        %s250 = smul.addr %s249, 2
        %s251 = smul.addr %s250, 4
        %s252 = scalar_lea.vmem %s0, %s251
        %p253 = scmp.lt.s32.totalorder %s19, 1
        %s254 = scalar_select %p253, %s19, 1
        %s255 = smul.addr %s254, 2
        %s256 = smul.addr %s255, 4
        %s257 = scalar_lea.vmem %s1, %s256
        %p258 = scmp.lt.s32.totalorder %s19, 1
        %s259 = scalar_select %p258, %s19, 1
        %s260 = smul.addr %s259, 2
        %s261 = smul.addr %s260, 4
        %s262 = scalar_lea.vmem %s2, %s261
        %v264 = vld [vmem:[%s252] sm:$0xf]
        %v265 = vld [vmem:[%s252 + $0x4] sm:$0xf]
        %v266 = vld [vmem:[%s257] sm:$0xf]
        %v267 = vld [vmem:[%s257 + $0x4] sm:$0xf]
        %v268 = vld [vmem:[%s262] sm:$0xf]
        %v269 = vld [vmem:[%s262 + $0x4] sm:$0xf]
        %v272 = vunpack.c.l.b16 %v266
        %v273 = vunpack.c.l.b16 %v267
        %v274 = vpack.c.b16 %v273, %v272
        %276 = vxpose.xlu0.c.b16.start [1/8] %v274, 128
        %277 = vxpose.xlu0.c.b16.cont [2/8] 0, 128
        %278 = vxpose.xlu0.c.b16.cont [3/8] 0, 128
        %279 = vxpose.xlu0.c.b16.cont [4/8] 0, 128
        %280 = vxpose.xlu0.c.b16.cont [5/8] 0, 128
        %281 = vxpose.xlu0.c.b16.cont [6/8] 0, 128
        %282 = vxpose.xlu0.c.b16.cont [7/8] 0, 128
        %283 = vxpose.xlu0.c.b16.end [8/8] 0, 128
        %v284 = vpop.trf.xlu0
        %v285 = vpop.trf.xlu0
        %v286 = vpop.trf.xlu0
        %v287 = vpop.trf.xlu0
        %v288 = vpop.trf.xlu0
        %v289 = vpop.trf.xlu0
        %v290 = vpop.trf.xlu0
        %v291 = vpop.trf.xlu0
        %v294 = vunpack.c.l.b16 %v264
        %v295 = vunpack.c.l.b16 %v265
        %v296 = vpack.c.b16 %v295, %v294
        %vm298 = vcmask 130048
        %v300 = vsel %vm298, %v284, 0
        %302 = vmatprep.subr.bf16.mxu0 0
        %303 = vmatpush1.bf16.msra.mxu0 0
        %304 = vmatprep.subr.bf16.mxu0 0
        %305 = vmatpush1.bf16.msra.mxu0 0
        %306 = vmatprep.subr.bf16.mxu0 0
        %307 = vmatpush1.bf16.msra.mxu0 0
        %308 = vmatprep.subr.bf16.mxu0 0
        %309 = vmatpush1.bf16.msra.mxu0 0
        %310 = vmatprep.subr.bf16.mxu0 0
        %311 = vmatpush1.bf16.msra.mxu0 0
        %312 = vmatprep.subr.bf16.mxu0 0
        %313 = vmatpush1.bf16.msra.mxu0 0
        %314 = vmatprep.subr.bf16.mxu0 0
        %315 = vmatpush1.bf16.msra.mxu0 0
        %316 = vmatprep.subr.bf16.mxu0 0
        %317 = vmatpush1.bf16.msra.mxu0 %v296
        %318 = vmatprep.subr.bf16.mxu0 0
        %319 = vmatpush2.bf16.msra.mxu0 0
        %320 = vmatprep.subr.bf16.mxu0 0
        %321 = vmatpush2.bf16.msra.mxu0 0
        %322 = vmatprep.subr.bf16.mxu0 0
        %323 = vmatpush2.bf16.msra.mxu0 0
        %324 = vmatprep.subr.bf16.mxu0 0
        %325 = vmatpush2.bf16.msra.mxu0 0
        %326 = vmatprep.subr.bf16.mxu0 0
        %327 = vmatpush2.bf16.msra.mxu0 0
        %328 = vmatprep.subr.bf16.mxu0 0
        %329 = vmatpush2.bf16.msra.mxu0 0
        %330 = vmatprep.subr.bf16.mxu0 0
        %331 = vmatpush2.bf16.msra.mxu0 0
        %332 = vmatprep.subr.bf16.mxu0 0
        %333 = vmatpush2.bf16.msra.mxu0 0
        %334 = vmatprep.mubr.bf16.mxu0 0
        %335 = vmatmul.mubr.bf16.gmra.mxu0 %v300
        %v336 = vpop.f32.mrf.mxu0
        %v337 = vadd.f32 0.0, %v336
        %v338 = vpop.f32.mrf.mxu0
        %v339 = vpop.f32.mrf.mxu0
        %v340 = vpop.f32.mrf.mxu0
        %341 = vdwg.mxu0
        %v342 = vpack.c.bf16 %v337, %v337
        %v343 = vld [vmem:[%s3] sm:$0xff]
        %v344 = vld [vmem:[%s3 + $0x8] sm:$0xf]
        %v345 = vld [vmem:[%s3 + $0xc] sm:$0xff]
        %v346 = vld [vmem:[%s3 + $0x14] sm:$0xf]
        %v347 = vld [vmem:[%s3 + $0x18] sm:$0xff]
        %v348 = vld [vmem:[%s3 + $0x20] sm:$0xf]
        %v349 = vld [vmem:[%s3 + $0x24] sm:$0xff]
        %v350 = vld [vmem:[%s3 + $0x2c] sm:$0xf]
        %v351 = vld [vmem:[%s3 + $0x30] sm:$0xff]
        %v352 = vld [vmem:[%s3 + $0x38] sm:$0xf]
        %v353 = vld [vmem:[%s3 + $0x3c] sm:$0xff]
        %v354 = vld [vmem:[%s3 + $0x44] sm:$0xf]
        %v355 = vld [vmem:[%s3 + $0x48] sm:$0xff]
        %v356 = vld [vmem:[%s3 + $0x50] sm:$0xf]
        %v357 = vld [vmem:[%s3 + $0x54] sm:$0xff]
        %v358 = vld [vmem:[%s3 + $0x5c] sm:$0xf]
        %v359 = vld [vmem:[%s3 + $0x60] sm:$0xff]
        %v360 = vld [vmem:[%s3 + $0x68] sm:$0xf]
        %v361 = vld [vmem:[%s3 + $0x6c] sm:$0xff]
        %v362 = vld [vmem:[%s3 + $0x74] sm:$0xf]
        %v363 = vld [vmem:[%s3 + $0x78] sm:$0xff]
        %v364 = vld [vmem:[%s3 + $0x80] sm:$0xf]
        %v365 = vld [vmem:[%s3 + $0x84] sm:$0xff]
        %v366 = vld [vmem:[%s3 + $0x8c] sm:$0xf]
        %v367 = vld [vmem:[%s3 + $0x90] sm:$0xff]
        %v368 = vld [vmem:[%s3 + $0x98] sm:$0xf]
        %v369 = vld [vmem:[%s3 + $0x9c] sm:$0xff]
        %v370 = vld [vmem:[%s3 + $0xa4] sm:$0xf]
        %v371 = vld [vmem:[%s3 + $0xa8] sm:$0xff]
        %v372 = vld [vmem:[%s3 + $0xb0] sm:$0xf]
        %v373 = vld [vmem:[%s3 + $0xb4] sm:$0xff]
        %v374 = vld [vmem:[%s3 + $0xbc] sm:$0xf]
        %v407 = vunpack.c.l.b16 %v343
        %v408 = vunpack.c.h.b16 %v343
        %v409 = vunpack.c.l.b16 %v344
        %v410 = vunpack.c.l.b16 %v345
        %v411 = vunpack.c.h.b16 %v345
        %v412 = vunpack.c.l.b16 %v346
        %v413 = vunpack.c.l.b16 %v347
        %v414 = vunpack.c.h.b16 %v347
        %v415 = vunpack.c.l.b16 %v348
        %v416 = vunpack.c.l.b16 %v349
        %v417 = vunpack.c.h.b16 %v349
        %v418 = vunpack.c.l.b16 %v350
        %v419 = vunpack.c.l.b16 %v351
        %v420 = vunpack.c.h.b16 %v351
        %v421 = vunpack.c.l.b16 %v352
        %v422 = vunpack.c.l.b16 %v353
        %v423 = vunpack.c.h.b16 %v353
        %v424 = vunpack.c.l.b16 %v354
        %v425 = vunpack.c.l.b16 %v355
        %v426 = vunpack.c.h.b16 %v355
        %v427 = vunpack.c.l.b16 %v356
        %v428 = vunpack.c.l.b16 %v357
        %v429 = vunpack.c.h.b16 %v357
        %v430 = vunpack.c.l.b16 %v358
        %v431 = vunpack.c.l.b16 %v359
        %v432 = vunpack.c.h.b16 %v359
        %v433 = vunpack.c.l.b16 %v360
        %v434 = vunpack.c.l.b16 %v361
        %v435 = vunpack.c.h.b16 %v361
        %v436 = vunpack.c.l.b16 %v362
        %v437 = vunpack.c.l.b16 %v363
        %v438 = vunpack.c.h.b16 %v363
        %v439 = vunpack.c.l.b16 %v364
        %v440 = vunpack.c.l.b16 %v365
        %v441 = vunpack.c.h.b16 %v365
        %v442 = vunpack.c.l.b16 %v366
        %v443 = vunpack.c.l.b16 %v367
        %v444 = vunpack.c.h.b16 %v367
        %v445 = vunpack.c.l.b16 %v368
        %v446 = vunpack.c.l.b16 %v369
        %v447 = vunpack.c.h.b16 %v369
        %v448 = vunpack.c.l.b16 %v370
        %v449 = vunpack.c.l.b16 %v371
        %v450 = vunpack.c.h.b16 %v371
        %v451 = vunpack.c.l.b16 %v372
        %v452 = vunpack.c.l.b16 %v373
        %v453 = vunpack.c.h.b16 %v373
        %v454 = vunpack.c.l.b16 %v374
        %v455 = vpack.c.b16 %v410, %v407
        %v456 = vpack.c.b16 %v411, %v408
        %v457 = vpack.c.b16 %v412, %v409
        %v458 = vpack.c.b16 %v416, %v413
        %v459 = vpack.c.b16 %v417, %v414
        %v460 = vpack.c.b16 %v418, %v415
        %v461 = vpack.c.b16 %v422, %v419
        %v462 = vpack.c.b16 %v423, %v420
        %v463 = vpack.c.b16 %v424, %v421
        %v464 = vpack.c.b16 %v428, %v425
        %v465 = vpack.c.b16 %v429, %v426
        %v466 = vpack.c.b16 %v430, %v427
        %v467 = vpack.c.b16 %v434, %v431
        %v468 = vpack.c.b16 %v435, %v432
        %v469 = vpack.c.b16 %v436, %v433
        %v470 = vpack.c.b16 %v440, %v437
        %v471 = vpack.c.b16 %v441, %v438
        %v472 = vpack.c.b16 %v442, %v439
        %v473 = vpack.c.b16 %v446, %v443
        %v474 = vpack.c.b16 %v447, %v444
        %v475 = vpack.c.b16 %v448, %v445
        %v476 = vpack.c.b16 %v452, %v449
        %v477 = vpack.c.b16 %v453, %v450
        %v478 = vpack.c.b16 %v454, %v451
        %503 = vmatprep.subr.bf16.mxu0 %v477
        %504 = vmatpush1.bf16.msra.mxu0 %v476
        %505 = vmatprep.subr.bf16.mxu0 %v474
        %506 = vmatpush1.bf16.msra.mxu0 %v473
        %507 = vmatprep.subr.bf16.mxu0 %v471
        %508 = vmatpush1.bf16.msra.mxu0 %v470
        %509 = vmatprep.subr.bf16.mxu0 %v468
        %510 = vmatpush1.bf16.msra.mxu0 %v467
        %511 = vmatprep.subr.bf16.mxu0 %v465
        %512 = vmatpush1.bf16.msra.mxu0 %v464
        %513 = vmatprep.subr.bf16.mxu0 %v462
        %514 = vmatpush1.bf16.msra.mxu0 %v461
        %515 = vmatprep.subr.bf16.mxu0 %v459
        %516 = vmatpush1.bf16.msra.mxu0 %v458
        %517 = vmatprep.subr.bf16.mxu0 %v456
        %518 = vmatpush1.bf16.msra.mxu0 %v455
        %519 = vmatprep.subr.bf16.mxu0 0
        %520 = vmatpush2.bf16.msra.mxu0 0
        %521 = vmatprep.subr.bf16.mxu0 0
        %522 = vmatpush2.bf16.msra.mxu0 0
        %523 = vmatprep.subr.bf16.mxu0 0
        %524 = vmatpush2.bf16.msra.mxu0 0
        %525 = vmatprep.subr.bf16.mxu0 0
        %526 = vmatpush2.bf16.msra.mxu0 0
        %527 = vmatprep.subr.bf16.mxu0 0
        %528 = vmatpush2.bf16.msra.mxu0 0
        %529 = vmatprep.subr.bf16.mxu0 0
        %530 = vmatpush2.bf16.msra.mxu0 0
        %531 = vmatprep.subr.bf16.mxu0 0
        %532 = vmatpush2.bf16.msra.mxu0 0
        %533 = vmatprep.subr.bf16.mxu0 0
        %534 = vmatpush2.bf16.msra.mxu0 0
        %535 = vmatprep.mubr.bf16.mxu0 0
        %536 = vmatmul.mubr.bf16.gmra.mxu0 %v342
        %v537 = vpop.f32.mrf.mxu0
        %v538 = vadd.f32 0.0, %v537
        %v539 = vpop.f32.mrf.mxu0
        %v540 = vadd.f32 0.0, %v539
        %v541 = vpop.f32.mrf.mxu0
        %v542 = vpop.f32.mrf.mxu0
        %543 = vdwg.mxu0
        %544 = vmatprep.subr.bf16.mxu0 0
        %545 = vmatpush1.bf16.msra.mxu0 %v478
        %546 = vmatprep.subr.bf16.mxu0 0
        %547 = vmatpush1.bf16.msra.mxu0 %v475
        %548 = vmatprep.subr.bf16.mxu0 0
        %549 = vmatpush1.bf16.msra.mxu0 %v472
        %550 = vmatprep.subr.bf16.mxu0 0
        %551 = vmatpush1.bf16.msra.mxu0 %v469
        %552 = vmatprep.subr.bf16.mxu0 0
        %553 = vmatpush1.bf16.msra.mxu0 %v466
        %554 = vmatprep.subr.bf16.mxu0 0
        %555 = vmatpush1.bf16.msra.mxu0 %v463
        %556 = vmatprep.subr.bf16.mxu0 0
        %557 = vmatpush1.bf16.msra.mxu0 %v460
        %558 = vmatprep.subr.bf16.mxu0 0
        %559 = vmatpush1.bf16.msra.mxu0 %v457
        %560 = vmatprep.subr.bf16.mxu0 0
        %561 = vmatpush2.bf16.msra.mxu0 0
        %562 = vmatprep.subr.bf16.mxu0 0
        %563 = vmatpush2.bf16.msra.mxu0 0
        %564 = vmatprep.subr.bf16.mxu0 0
        %565 = vmatpush2.bf16.msra.mxu0 0
        %566 = vmatprep.subr.bf16.mxu0 0
        %567 = vmatpush2.bf16.msra.mxu0 0
        %568 = vmatprep.subr.bf16.mxu0 0
        %569 = vmatpush2.bf16.msra.mxu0 0
        %570 = vmatprep.subr.bf16.mxu0 0
        %571 = vmatpush2.bf16.msra.mxu0 0
        %572 = vmatprep.subr.bf16.mxu0 0
        %573 = vmatpush2.bf16.msra.mxu0 0
        %574 = vmatprep.subr.bf16.mxu0 0
        %575 = vmatpush2.bf16.msra.mxu0 0
        %576 = vmatprep.mubr.bf16.mxu0 0
        %577 = vmatmul.mubr.bf16.gmra.mxu0 %v342
        %v578 = vpop.f32.mrf.mxu0
        %v579 = vadd.f32 0.0, %v578
        %v580 = vpop.f32.mrf.mxu0
        %v581 = vpop.f32.mrf.mxu0
        %v582 = vpop.f32.mrf.mxu0
        %583 = vdwg.mxu0
        %v584 = vpack.c.bf16 %v538, %v538
        %v585 = vpack.c.bf16 %v540, %v540
        %586 = vmatprep.subr.bf16.mxu0 0
        %587 = vmatpush1.bf16.xpose.msra.mxu0 0
        %588 = vmatprep.subr.bf16.mxu0 0
        %589 = vmatpush1.bf16.xpose.msra.mxu0 0
        %590 = vmatprep.subr.bf16.mxu0 0
        %591 = vmatpush1.bf16.xpose.msra.mxu0 0
        %592 = vmatprep.subr.bf16.mxu0 0
        %593 = vmatpush1.bf16.xpose.msra.mxu0 0
        %594 = vmatprep.subr.bf16.mxu0 0
        %595 = vmatpush1.bf16.xpose.msra.mxu0 0
        %596 = vmatprep.subr.bf16.mxu0 0
        %597 = vmatpush1.bf16.xpose.msra.mxu0 0
        %598 = vmatprep.subr.bf16.mxu0 0
        %599 = vmatpush1.bf16.xpose.msra.mxu0 0
        %600 = vmatprep.subr.bf16.mxu0 0
        %601 = vmatpush1.bf16.xpose.msra.mxu0 %v585
        %602 = vmatprep.subr.bf16.mxu0 0
        %603 = vmatpush2.bf16.xpose.msra.mxu0 0
        %604 = vmatprep.subr.bf16.mxu0 0
        %605 = vmatpush2.bf16.xpose.msra.mxu0 0
        %606 = vmatprep.subr.bf16.mxu0 0
        %607 = vmatpush2.bf16.xpose.msra.mxu0 0
        %608 = vmatprep.subr.bf16.mxu0 0
        %609 = vmatpush2.bf16.xpose.msra.mxu0 0
        %610 = vmatprep.subr.bf16.mxu0 0
        %611 = vmatpush2.bf16.xpose.msra.mxu0 0
        %612 = vmatprep.subr.bf16.mxu0 0
        %613 = vmatpush2.bf16.xpose.msra.mxu0 0
        %614 = vmatprep.subr.bf16.mxu0 0
        %615 = vmatpush2.bf16.xpose.msra.mxu0 0
        %616 = vmatprep.subr.bf16.mxu0 0
        %617 = vmatpush2.bf16.xpose.msra.mxu0 0
        %618 = vmatprep.mubr.bf16.mxu0 0
        %619 = vmatmul.mubr.bf16.gmra.mxu0 %v584
        %v620 = vpop.f32.mrf.mxu0
        %v621 = vadd.f32 0.0, %v620
        %v622 = vpop.f32.mrf.mxu0
        %v623 = vpop.f32.mrf.mxu0
        %v624 = vpop.f32.mrf.mxu0
        %625 = vdwg.mxu0
        %v626 = vmul.f32 %v621, 0.088388346
        %vm627 = vcmask 64512
        %v628 = vsel %vm627, %v626, -inf
        %629 = vmax.xlane.f32.xlu0 %v628
        %v630 = vpop.xlane.xlu0 %629
        %v631 = vsub.f32 %v626, %v630
        %v632 = vmul.f32 %v631, 1.442695
        %v633 = vpow.pop %v632
        %v634 = vsel %vm627, %v633, 0.0
        %635 = vadd.xlane.f32.xlu0 %v634
        %v636 = vpop.xlane.xlu0 %635
        %v637 = vrcp.pop %v636
        %v638 = vmul.f32 %v633, %v637
        %v639 = vpack.c.bf16 %v638, %v638
        %v640 = vpack.c.bf16 %v579, %v579
        %v642 = vsel %vm627, %v639, 0
        %vm644 = vcmask 1043456
        %v646 = vsel %vm644, %v640, 0
        %648 = vmatprep.subr.bf16.mxu0 0
        %649 = vmatpush1.bf16.msra.mxu0 0
        %650 = vmatprep.subr.bf16.mxu0 0
        %651 = vmatpush1.bf16.msra.mxu0 0
        %652 = vmatprep.subr.bf16.mxu0 0
        %653 = vmatpush1.bf16.msra.mxu0 0
        %654 = vmatprep.subr.bf16.mxu0 0
        %655 = vmatpush1.bf16.msra.mxu0 0
        %656 = vmatprep.subr.bf16.mxu0 0
        %657 = vmatpush1.bf16.msra.mxu0 0
        %658 = vmatprep.subr.bf16.mxu0 0
        %659 = vmatpush1.bf16.msra.mxu0 0
        %660 = vmatprep.subr.bf16.mxu0 0
        %661 = vmatpush1.bf16.msra.mxu0 0
        %662 = vmatprep.subr.bf16.mxu0 0
        %663 = vmatpush1.bf16.msra.mxu0 %v646
        %664 = vmatprep.subr.bf16.mxu0 0
        %665 = vmatpush2.bf16.msra.mxu0 0
        %666 = vmatprep.subr.bf16.mxu0 0
        %667 = vmatpush2.bf16.msra.mxu0 0
        %668 = vmatprep.subr.bf16.mxu0 0
        %669 = vmatpush2.bf16.msra.mxu0 0
        %670 = vmatprep.subr.bf16.mxu0 0
        %671 = vmatpush2.bf16.msra.mxu0 0
        %672 = vmatprep.subr.bf16.mxu0 0
        %673 = vmatpush2.bf16.msra.mxu0 0
        %674 = vmatprep.subr.bf16.mxu0 0
        %675 = vmatpush2.bf16.msra.mxu0 0
        %676 = vmatprep.subr.bf16.mxu0 0
        %677 = vmatpush2.bf16.msra.mxu0 0
        %678 = vmatprep.subr.bf16.mxu0 0
        %679 = vmatpush2.bf16.msra.mxu0 0
        %680 = vmatprep.mubr.bf16.mxu0 0
        %681 = vmatmul.mubr.bf16.gmra.mxu0 %v642
        %v682 = vpop.f32.mrf.mxu0
        %v683 = vadd.f32 0.0, %v682
        %v684 = vpop.f32.mrf.mxu0
        %v685 = vpop.f32.mrf.mxu0
        %v686 = vpop.f32.mrf.mxu0
        %687 = vdwg.mxu0
        %v688 = vpack.c.bf16 %v683, %v683
        %v689 = vld [vmem:[%s4] sm:$0xf]
        %v690 = vld [vmem:[%s4 + $0x4] sm:$0xf]
        %v691 = vld [vmem:[%s4 + $0x8] sm:$0xf]
        %v692 = vld [vmem:[%s4 + $0xc] sm:$0xf]
        %v693 = vld [vmem:[%s4 + $0x10] sm:$0xf]
        %v694 = vld [vmem:[%s4 + $0x14] sm:$0xf]
        %v695 = vld [vmem:[%s4 + $0x18] sm:$0xf]
        %v696 = vld [vmem:[%s4 + $0x1c] sm:$0xf]
        %v697 = vld [vmem:[%s4 + $0x20] sm:$0xf]
        %v698 = vld [vmem:[%s4 + $0x24] sm:$0xf]
        %v699 = vld [vmem:[%s4 + $0x28] sm:$0xf]
        %v700 = vld [vmem:[%s4 + $0x2c] sm:$0xf]
        %v701 = vld [vmem:[%s4 + $0x30] sm:$0xf]
        %v702 = vld [vmem:[%s4 + $0x34] sm:$0xf]
        %v703 = vld [vmem:[%s4 + $0x38] sm:$0xf]
        %v704 = vld [vmem:[%s4 + $0x3c] sm:$0xf]
        %v721 = vunpack.c.l.b16 %v689
        %v722 = vunpack.c.l.b16 %v690
        %v723 = vunpack.c.l.b16 %v691
        %v724 = vunpack.c.l.b16 %v692
        %v725 = vunpack.c.l.b16 %v693
        %v726 = vunpack.c.l.b16 %v694
        %v727 = vunpack.c.l.b16 %v695
        %v728 = vunpack.c.l.b16 %v696
        %v729 = vunpack.c.l.b16 %v697
        %v730 = vunpack.c.l.b16 %v698
        %v731 = vunpack.c.l.b16 %v699
        %v732 = vunpack.c.l.b16 %v700
        %v733 = vunpack.c.l.b16 %v701
        %v734 = vunpack.c.l.b16 %v702
        %v735 = vunpack.c.l.b16 %v703
        %v736 = vunpack.c.l.b16 %v704
        %v737 = vpack.c.b16 %v722, %v721
        %v738 = vpack.c.b16 %v724, %v723
        %v739 = vpack.c.b16 %v726, %v725
        %v740 = vpack.c.b16 %v728, %v727
        %v741 = vpack.c.b16 %v730, %v729
        %v742 = vpack.c.b16 %v732, %v731
        %v743 = vpack.c.b16 %v734, %v733
        %v744 = vpack.c.b16 %v736, %v735
        %753 = vmatprep.subr.bf16.mxu0 0
        %754 = vmatpush1.bf16.msra.mxu0 %v744
        %755 = vmatprep.subr.bf16.mxu0 0
        %756 = vmatpush1.bf16.msra.mxu0 %v743
        %757 = vmatprep.subr.bf16.mxu0 0
        %758 = vmatpush1.bf16.msra.mxu0 %v742
        %759 = vmatprep.subr.bf16.mxu0 0
        %760 = vmatpush1.bf16.msra.mxu0 %v741
        %761 = vmatprep.subr.bf16.mxu0 0
        %762 = vmatpush1.bf16.msra.mxu0 %v740
        %763 = vmatprep.subr.bf16.mxu0 0
        %764 = vmatpush1.bf16.msra.mxu0 %v739
        %765 = vmatprep.subr.bf16.mxu0 0
        %766 = vmatpush1.bf16.msra.mxu0 %v738
        %767 = vmatprep.subr.bf16.mxu0 0
        %768 = vmatpush1.bf16.msra.mxu0 %v737
        %769 = vmatprep.subr.bf16.mxu0 0
        %770 = vmatpush2.bf16.msra.mxu0 0
        %771 = vmatprep.subr.bf16.mxu0 0
        %772 = vmatpush2.bf16.msra.mxu0 0
        %773 = vmatprep.subr.bf16.mxu0 0
        %774 = vmatpush2.bf16.msra.mxu0 0
        %775 = vmatprep.subr.bf16.mxu0 0
        %776 = vmatpush2.bf16.msra.mxu0 0
        %777 = vmatprep.subr.bf16.mxu0 0
        %778 = vmatpush2.bf16.msra.mxu0 0
        %779 = vmatprep.subr.bf16.mxu0 0
        %780 = vmatpush2.bf16.msra.mxu0 0
        %781 = vmatprep.subr.bf16.mxu0 0
        %782 = vmatpush2.bf16.msra.mxu0 0
        %783 = vmatprep.subr.bf16.mxu0 0
        %784 = vmatpush2.bf16.msra.mxu0 0
        %785 = vmatprep.mubr.bf16.mxu0 0
        %786 = vmatmul.mubr.bf16.gmra.mxu0 %v688
        %v787 = vpop.f32.mrf.mxu0
        %v788 = vadd.f32 0.0, %v787
        %v789 = vpop.f32.mrf.mxu0
        %v790 = vpop.f32.mrf.mxu0
        %v791 = vpop.f32.mrf.mxu0
        %792 = vdwg.mxu0
        %v793 = vpack.c.bf16 %v788, %v788
        %v796 = vunpack.c.l.b16 %v268
        %v797 = vunpack.c.l.b16 %v269
        %v798 = vpack.c.b16 %v797, %v796
        %v800 = vsel %vm627, %v798, 0
        %v803 = vsel %vm644, %v793, 0
        %805 = vmatprep.subr.bf16.mxu0 0
        %806 = vmatpush1.bf16.msra.mxu0 0
        %807 = vmatprep.subr.bf16.mxu0 0
        %808 = vmatpush1.bf16.msra.mxu0 0
        %809 = vmatprep.subr.bf16.mxu0 0
        %810 = vmatpush1.bf16.msra.mxu0 0
        %811 = vmatprep.subr.bf16.mxu0 0
        %812 = vmatpush1.bf16.msra.mxu0 0
        %813 = vmatprep.subr.bf16.mxu0 0
        %814 = vmatpush1.bf16.msra.mxu0 0
        %815 = vmatprep.subr.bf16.mxu0 0
        %816 = vmatpush1.bf16.msra.mxu0 0
        %817 = vmatprep.subr.bf16.mxu0 0
        %818 = vmatpush1.bf16.msra.mxu0 0
        %819 = vmatprep.subr.bf16.mxu0 0
        %820 = vmatpush1.bf16.msra.mxu0 %v803
        %821 = vmatprep.subr.bf16.mxu0 0
        %822 = vmatpush2.bf16.msra.mxu0 0
        %823 = vmatprep.subr.bf16.mxu0 0
        %824 = vmatpush2.bf16.msra.mxu0 0
        %825 = vmatprep.subr.bf16.mxu0 0
        %826 = vmatpush2.bf16.msra.mxu0 0
        %827 = vmatprep.subr.bf16.mxu0 0
        %828 = vmatpush2.bf16.msra.mxu0 0
        %829 = vmatprep.subr.bf16.mxu0 0
        %830 = vmatpush2.bf16.msra.mxu0 0
        %831 = vmatprep.subr.bf16.mxu0 0
        %832 = vmatpush2.bf16.msra.mxu0 0
        %833 = vmatprep.subr.bf16.mxu0 0
        %834 = vmatpush2.bf16.msra.mxu0 0
        %835 = vmatprep.subr.bf16.mxu0 0
        %836 = vmatpush2.bf16.msra.mxu0 0
        %837 = vmatprep.mubr.bf16.mxu0 0
        %838 = vmatmul.mubr.bf16.gmra.mxu0 %v800
        %v839 = vpop.f32.mrf.mxu0
        %v840 = vadd.f32 0.0, %v839
        %v841 = vpop.f32.mrf.mxu0
        %v842 = vpop.f32.mrf.mxu0
        %v843 = vadd.f32 0.0, %v842
        %v844 = vpop.f32.mrf.mxu0
        %845 = vdwg.mxu0
        %846 = vst [vmem:[%s247] sm:$0xff] %v840
        %847 = vst [vmem:[%s247 + $0x8] sm:$0xff] %v843
        %s848 = sand.u32 %s147, 1
        %s849 = scalar_lea.sflag [#allocation3], %s848
        %s850 = sand.u32 %s147, 1
        %s851 = smul.addr %s850, 16
        %s852 = scalar_lea.vmem [#allocation2], %s851
        // Predicated region
        $region41: #{mod_layer_forward.1} parent=39 // pred_check
          %p853 = pneg %p157
        $region42: #{mod_layer_forward.1} parent=39 // pred_check_branch
          %855 = sbr.rel (%p853) target = $region44
        $region43: #{mod_layer_forward.1} parent=39 // pred_region
          %s857 = ssub.s32 256, 256
          %858 = vsyncadd %s849, %s857
          %s859 = smul.addr %s19, 2
          %s860 = smul.addr %s859, 128
          %s861 = scalar_lea.hbm %s5, %s860
          %s862 = sshll.u32 %s852, 4
          %s863 = int_to_ptr.vmem [resolvable:$true] %s862
          %868 = dma.vmem_to_hbm [thread:$0]  %s863, 256, %s861, %s849, 128, 128, 8
        $region44: #{mod_layer_forward.1} parent=39 // pred_fallthru
          _
      $region40: #{mod_layer_forward.1} parent=5 // pred_fallthru
        _
      %p869 = scmp.le.s32.totalorder 2, %s14
      // Predicated region
      $region45: #{mod_layer_forward.1} parent=5 // pred_check
        %p870 = pneg %p869
      $region46: #{mod_layer_forward.1} parent=5 // pred_check_branch
        %872 = sbr.rel (%p870) target = $region48
      $region47: #{mod_layer_forward.1} parent=5 // pred_region
        %s873 = ssub.s32 %s14, 2
        // Predicated region
        $region49: #{mod_layer_forward.1} parent=47 // pred_check
          %p874 = pneg %p163
        $region50: #{mod_layer_forward.1} parent=47 // pred_check_branch
          %876 = sbr.rel (%p874) target = $region52
        $region51: #{mod_layer_forward.1} parent=47 // pred_region
          %s877 = sand.u32 %s148, 1
          %s878 = scalar_lea.sflag [#allocation3], %s877
          %s879 = sand.u32 %s148, 1
          %s880 = smul.addr %s879, 16
          %s881 = scalar_lea.vmem [#allocation2], %s880
          %882 = dma.done %s878, 256
        $region52: #{mod_layer_forward.1} parent=47 // pred_fallthru
          _
      $region48: #{mod_layer_forward.1} parent=5 // pred_fallthru
        _
    $region6: #{mod_layer_forward.1} parent=1 // loop_footer
      %s18 = sadd.s32 1, %s14
    $region7: #{mod_layer_forward.1} parent=1 // loop_footer_branch
      %13 = sbr.rel target = $region3
    $region8: #{mod_layer_forward.1} parent=1 // loop_exit
      _
    %883 = vsyncpa [#allocation3], 1
    %s884 = scalar_lea.sflag [#allocation3], 1
    %885 = vsyncpa %s884, 1

</llo_original>
